<compile_context>
chip_gen: v7x
topology: tpu7x:2x2x1
jax: 0.10.0
libtpu: 0.0.40
codegen_flags: <defaults>
</compile_context>

<pallas_src>
import jax
import jax.numpy as jnp
from jax.experimental import pallas as pl
from jax.experimental.pallas import tpu as pltpu


def _round_up(x, m):
    return ((x + m - 1) // m) * m


def _cdiv(a, b):
    return (a + b - 1) // b


# ----------------------------------------------------------------------------
# Kernel: one batch tile of the fused forward pass (all lanes are valid data).
# ----------------------------------------------------------------------------
def autoencoder_kernel(x_ref,
                       w1_ref, b1_ref,
                       w23_ref, b23_ref,
                       w4_ref, b4_ref,
                       out_ref):
    """
    x_ref   : (TB, W)   W = pack*input_dim (128 when input_dim divides 128)
    w1_ref  : (W, Hp)   b1_ref  : (1, Hp)   Hp = pack*6   (block-diagonal)
    w23_ref : (Hp, Hp)  b23_ref : (1, Hp)   (folded enc-L2 @ dec-L1)
    w4_ref  : (Hp, W)   b4_ref  : (1, W)
    out_ref : (TB, W)
    """
    x = x_ref[...]

    # encoder layer 1 + ReLU
    h1 = jnp.dot(x, w1_ref[...], preferred_element_type=jnp.float32) + b1_ref[...]
    h1 = jnp.maximum(h1, 0.0)

    # folded (encoder layer 2) @ (decoder layer 1) + ReLU
    h2 = jnp.dot(h1, w23_ref[...], preferred_element_type=jnp.float32) + b23_ref[...]
    h2 = jnp.maximum(h2, 0.0)

    # decoder layer 2 + Sigmoid (exp -> EUP; every lane is a real output)
    logits = jnp.dot(h2, w4_ref[...], preferred_element_type=jnp.float32) + b4_ref[...]
    out_ref[...] = (1.0 / (1.0 + jnp.exp(-logits))).astype(out_ref.dtype)


# ----------------------------------------------------------------------------
# One-time weight preparation (hoisted out of the per-call path).
# ----------------------------------------------------------------------------
def _block_diag(w, n):
    r, c = w.shape
    out = jnp.zeros((n * r, n * c), w.dtype)
    for i in range(n):
        out = out.at[i * r:(i + 1) * r, i * c:(i + 1) * c].set(w)
    return out


def prepare_params(params):
    """PyTorch-convention (out,in) weights -> packed block-diagonal f32 weights."""
    input_dim = params["enc_w1"].shape[1]
    pack = max(1, 128 // input_dim)   # batch rows packed per 128-lane row

    # (out, in) -> (in, out);  y = x @ W + b
    w1 = params["enc_w1"].T
    b1 = params["enc_b1"]
    w2 = params["enc_w2"].T
    b2 = params["enc_b2"]
    w3 = params["dec_w1"].T
    b3 = params["dec_b1"]
    w4 = params["dec_w2"].T
    b4 = params["dec_b2"]

    # Fold the two Linear layers with no nonlinearity between them (exact).
    w23 = w2 @ w3
    b23 = b2 @ w3 + b3

    packed = dict(
        w1=_block_diag(w1, pack),  b1=jnp.tile(b1, pack)[None, :],
        w23=_block_diag(w23, pack), b23=jnp.tile(b23, pack)[None, :],
        w4=_block_diag(w4, pack),  b4=jnp.tile(b4, pack)[None, :],
    )
    return jax.tree_util.tree_map(lambda a: a.astype(jnp.float32), packed)


# ----------------------------------------------------------------------------
# Forward pass (jitted; shapes are static so all tiling math is Python ints).
# ----------------------------------------------------------------------------
def _choose_block_rows(n_rows):
    """n_rows = packed batch rows. Target ~512 packed rows (~4096 batch rows,
    ~256 KiB/tile) per grid step, but keep >= 2 steps so v7x uses both TCs."""
    if n_rows <= 16:
        return n_rows                       # single block; equals full extent
    half = _round_up(_cdiv(n_rows, 2), 8)   # at least 2 grid steps
    return min(512, half)


@jax.jit
def autoencoder_forward(x, packed):
    """x: (B, input_dim) f32.  packed: output of prepare_params."""
    B, D = x.shape
    w1 = packed["w1"]
    pack = w1.shape[0] // D          # packed rows per lane row (static)
    W = pack * D                     # lane width of packed activations
    Hp = w1.shape[1]                 # pack * hidden

    n_raw = _cdiv(B, pack)
    block_rows = _choose_block_rows(n_raw)
    n = _round_up(n_raw, block_rows)
    Bp = n * pack

    if Bp != B:
        x = jnp.pad(x, ((0, Bp - B), (0, 0)))
    xp = x.reshape(n, W)             # zero-copy lane packing in HBM

    grid = (n // block_rows,)

    x_spec = pl.BlockSpec((block_rows, W), lambda i: (i, 0))
    w1_spec = pl.BlockSpec((W, Hp), lambda i: (0, 0))
    b1_spec = pl.BlockSpec((1, Hp), lambda i: (0, 0))
    w23_spec = pl.BlockSpec((Hp, Hp), lambda i: (0, 0))
    b23_spec = pl.BlockSpec((1, Hp), lambda i: (0, 0))
    w4_spec = pl.BlockSpec((Hp, W), lambda i: (0, 0))
    b4_spec = pl.BlockSpec((1, W), lambda i: (0, 0))
    out_spec = pl.BlockSpec((block_rows, W), lambda i: (i, 0))

    out_packed = pl.pallas_call(
        autoencoder_kernel,
        out_shape=jax.ShapeDtypeStruct((n, W), jnp.float32),
        grid=grid,
        in_specs=[x_spec, w1_spec, b1_spec, w23_spec, b23_spec, w4_spec, b4_spec],
        out_specs=out_spec,
        compiler_params=pltpu.CompilerParams(
            dimension_semantics=("parallel",),   # megacore / v7x 2-TC sharding
        ),
    )(xp, packed["w1"], packed["b1"], packed["w23"], packed["b23"],
      packed["w4"], packed["b4"])

    out = out_packed.reshape(Bp, D)
    return out[:B] if Bp != B else out


# ----------------------------------------------------------------------------
# Reference + deterministic init (mimics nn.Linear: uniform +-1/sqrt(fan_in)).
# ----------------------------------------------------------------------------
def init_params(key, input_dim, encoding_dim):
    ks = jax.random.split(key, 8)

    def lin(kw, kb, fan_in, fan_out):
        bound = 1.0 / jnp.sqrt(fan_in)
        w = jax.random.uniform(kw, (fan_out, fan_in), jnp.float32, -bound, bound)
        b = jax.random.uniform(kb, (fan_out,), jnp.float32, -bound, bound)
        return w, b

    enc_w1, enc_b1 = lin(ks[0], ks[1], input_dim, 6)
    enc_w2, enc_b2 = lin(ks[2], ks[3], 6, encoding_dim)
    dec_w1, dec_b1 = lin(ks[4], ks[5], encoding_dim, 6)
    dec_w2, dec_b2 = lin(ks[6], ks[7], 6, input_dim)
    return dict(enc_w1=enc_w1, enc_b1=enc_b1, enc_w2=enc_w2, enc_b2=enc_b2,
                dec_w1=dec_w1, dec_b1=dec_b1, dec_w2=dec_w2, dec_b2=dec_b2)


def reference_forward(x, p):
    h = jnp.maximum(x @ p["enc_w1"].T + p["enc_b1"], 0.0)
    emb = h @ p["enc_w2"].T + p["enc_b2"]
    h = jnp.maximum(emb @ p["dec_w1"].T + p["dec_b1"], 0.0)
    return jax.nn.sigmoid(h @ p["dec_w2"].T + p["dec_b2"])


if __name__ == "__main__":
    batch = 256
    input_dim = 16
    encoding_dim = 4

    key = jax.random.PRNGKey(0)
    k_x, k_p = jax.random.split(key)
    x = jax.random.normal(k_x, (batch, input_dim), jnp.float32)
    params = init_params(k_p, input_dim, encoding_dim)

    packed = prepare_params(params)          # one-time weight prep (hoisted)

    out = jax.block_until_ready(autoencoder_forward(x, packed))
    ref = reference_forward(x, params)

    assert out.shape == (batch, input_dim)
    assert jnp.allclose(out, ref, atol=1e-4, rtol=1e-4), "mismatch vs reference"

    print("KERNEL_OK")
</pallas_src>

<mosaic_0001>
module attributes {stable_mosaic.version = 11 : i64} {
  func.func @autoencoder_kernel(%arg0: i32, %arg1: memref<16x128xf32, #tpu.memory_space<vmem>>, %arg2: memref<128x48xf32, #tpu.memory_space<vmem>>, %arg3: memref<1x48xf32, #tpu.memory_space<vmem>>, %arg4: memref<48x48xf32, #tpu.memory_space<vmem>>, %arg5: memref<1x48xf32, #tpu.memory_space<vmem>>, %arg6: memref<48x128xf32, #tpu.memory_space<vmem>>, %arg7: memref<1x128xf32, #tpu.memory_space<vmem>>, %arg8: memref<16x128xf32, #tpu.memory_space<vmem>>) attributes {dimension_semantics = [#tpu.dimension_semantics<parallel>], iteration_bounds = array<i64: 2>, scalar_prefetch = 0 : i64, scratch_operands = 0 : i64, tpu.core_type = #tpu.core_type<tc>, window_params = [{transform_indices = @transform_0, window_bounds = array<i64: 16, 128>}, {pipeline_mode = #tpu.pipeline_mode<synchronous>, transform_indices = @transform_1, window_bounds = array<i64: 128, 48>}, {pipeline_mode = #tpu.pipeline_mode<synchronous>, transform_indices = @transform_2, window_bounds = array<i64: 1, 48>}, {pipeline_mode = #tpu.pipeline_mode<synchronous>, transform_indices = @transform_3, window_bounds = array<i64: 48, 48>}, {pipeline_mode = #tpu.pipeline_mode<synchronous>, transform_indices = @transform_4, window_bounds = array<i64: 1, 48>}, {pipeline_mode = #tpu.pipeline_mode<synchronous>, transform_indices = @transform_5, window_bounds = array<i64: 48, 128>}, {pipeline_mode = #tpu.pipeline_mode<synchronous>, transform_indices = @transform_6, window_bounds = array<i64: 1, 128>}, {transform_indices = @transform_7, window_bounds = array<i64: 16, 128>}]} {
    %c0 = arith.constant 0 : index
    %c0_0 = arith.constant 0 : index
    %0 = vector.load %arg1[%c0, %c0_0] : memref<16x128xf32, #tpu.memory_space<vmem>>, vector<16x128xf32>
    %c0_1 = arith.constant 0 : index
    %c0_2 = arith.constant 0 : index
    %1 = vector.load %arg2[%c0_1, %c0_2] : memref<128x48xf32, #tpu.memory_space<vmem>>, vector<128x48xf32>
    %cst = arith.constant dense<0.000000e+00> : vector<16x48xf32>
    %2 = tpu.matmul %0, %1, %cst {dimension_numbers = #tpu.dot_dimension_numbers<[1], [0], [0], [1], [0, 0, 1, 1], [], []>} : vector<16x128xf32>, vector<128x48xf32>, vector<16x48xf32> -> vector<16x48xf32>
    %c0_3 = arith.constant 0 : index
    %c0_4 = arith.constant 0 : index
    %3 = vector.load %arg3[%c0_3, %c0_4] : memref<1x48xf32, #tpu.memory_space<vmem>>, vector<1x48xf32>
    %4 = vector.broadcast %3 : vector<1x48xf32> to vector<16x48xf32>
    %5 = arith.addf %2, %4 : vector<16x48xf32>
    %cst_5 = arith.constant 0.000000e+00 : f32
    %6 = vector.broadcast %cst_5 : f32 to vector<16x48xf32>
    %7 = arith.maximumf %5, %6 : vector<16x48xf32>
    %c0_6 = arith.constant 0 : index
    %c0_7 = arith.constant 0 : index
    %8 = vector.load %arg4[%c0_6, %c0_7] : memref<48x48xf32, #tpu.memory_space<vmem>>, vector<48x48xf32>
    %cst_8 = arith.constant dense<0.000000e+00> : vector<16x48xf32>
    %9 = tpu.matmul %7, %8, %cst_8 {dimension_numbers = #tpu.dot_dimension_numbers<[1], [0], [0], [1], [0, 0, 1, 1], [], []>} : vector<16x48xf32>, vector<48x48xf32>, vector<16x48xf32> -> vector<16x48xf32>
    %c0_9 = arith.constant 0 : index
    %c0_10 = arith.constant 0 : index
    %10 = vector.load %arg5[%c0_9, %c0_10] : memref<1x48xf32, #tpu.memory_space<vmem>>, vector<1x48xf32>
    %11 = vector.broadcast %10 : vector<1x48xf32> to vector<16x48xf32>
    %12 = arith.addf %9, %11 : vector<16x48xf32>
    %cst_11 = arith.constant 0.000000e+00 : f32
    %13 = vector.broadcast %cst_11 : f32 to vector<16x48xf32>
    %14 = arith.maximumf %12, %13 : vector<16x48xf32>
    %c0_12 = arith.constant 0 : index
    %c0_13 = arith.constant 0 : index
    %15 = vector.load %arg6[%c0_12, %c0_13] : memref<48x128xf32, #tpu.memory_space<vmem>>, vector<48x128xf32>
    %cst_14 = arith.constant dense<0.000000e+00> : vector<16x128xf32>
    %16 = tpu.matmul %14, %15, %cst_14 {dimension_numbers = #tpu.dot_dimension_numbers<[1], [0], [0], [1], [0, 0, 1, 1], [], []>} : vector<16x48xf32>, vector<48x128xf32>, vector<16x128xf32> -> vector<16x128xf32>
    %c0_15 = arith.constant 0 : index
    %c0_16 = arith.constant 0 : index
    %17 = vector.load %arg7[%c0_15, %c0_16] : memref<1x128xf32, #tpu.memory_space<vmem>>, vector<1x128xf32>
    %18 = vector.broadcast %17 : vector<1x128xf32> to vector<16x128xf32>
    %19 = arith.addf %16, %18 : vector<16x128xf32>
    %cst_17 = arith.constant 0.000000e+00 : f32
    %20 = vector.broadcast %cst_17 : f32 to vector<16x128xf32>
    %21 = arith.subf %20, %19 : vector<16x128xf32>
    %22 = math.exp %21 : vector<16x128xf32>
    %cst_18 = arith.constant 1.000000e+00 : f32
    %23 = vector.broadcast %cst_18 : f32 to vector<16x128xf32>
    %24 = arith.addf %23, %22 : vector<16x128xf32>
    %cst_19 = arith.constant 1.000000e+00 : f32
    %25 = vector.broadcast %cst_19 : f32 to vector<16x128xf32>
    %26 = arith.divf %25, %24 : vector<16x128xf32>
    %c0_20 = arith.constant 0 : index
    %c0_21 = arith.constant 0 : index
    %27 = vector.load %arg8[%c0_20, %c0_21] : memref<16x128xf32, #tpu.memory_space<vmem>>, vector<16x128xf32>
    tpu.vector_store %arg8[%c0_20, %c0_21], %26 {strides = array<i32>} : memref<16x128xf32, #tpu.memory_space<vmem>>, vector<16x128xf32>,
    return
  }
  func.func @transform_0(%arg0: i32) -> (i32, i32) {
    %c0_i32 = arith.constant 0 : i32
    %c0_i32_0 = arith.constant 0 : i32
    return %arg0, %c0_i32 : i32, i32
  }
  func.func @transform_1(%arg0: i32) -> (i32, i32) {
    %c0_i32 = arith.constant 0 : i32
    %c0_i32_0 = arith.constant 0 : i32
    %c0_i32_1 = arith.constant 0 : i32
    return %c0_i32, %c0_i32_0 : i32, i32
  }
  func.func @transform_2(%arg0: i32) -> (i32, i32) {
    %c0_i32 = arith.constant 0 : i32
    %c0_i32_0 = arith.constant 0 : i32
    %c0_i32_1 = arith.constant 0 : i32
    return %c0_i32, %c0_i32_0 : i32, i32
  }
  func.func @transform_3(%arg0: i32) -> (i32, i32) {
    %c0_i32 = arith.constant 0 : i32
    %c0_i32_0 = arith.constant 0 : i32
    %c0_i32_1 = arith.constant 0 : i32
    return %c0_i32, %c0_i32_0 : i32, i32
  }
  func.func @transform_4(%arg0: i32) -> (i32, i32) {
    %c0_i32 = arith.constant 0 : i32
    %c0_i32_0 = arith.constant 0 : i32
    %c0_i32_1 = arith.constant 0 : i32
    return %c0_i32, %c0_i32_0 : i32, i32
  }
  func.func @transform_5(%arg0: i32) -> (i32, i32) {
    %c0_i32 = arith.constant 0 : i32
    %c0_i32_0 = arith.constant 0 : i32
    %c0_i32_1 = arith.constant 0 : i32
    return %c0_i32, %c0_i32_0 : i32, i32
  }
  func.func @transform_6(%arg0: i32) -> (i32, i32) {
    %c0_i32 = arith.constant 0 : i32
    %c0_i32_0 = arith.constant 0 : i32
    %c0_i32_1 = arith.constant 0 : i32
    return %c0_i32, %c0_i32_0 : i32, i32
  }
  func.func @transform_7(%arg0: i32) -> (i32, i32) {
    %c0_i32 = arith.constant 0 : i32
    %c0_i32_0 = arith.constant 0 : i32
    return %arg0, %c0_i32 : i32, i32
  }
}

</mosaic_0001>

<llo_original>
// kernel: autoencoder_forward.1
$region0: #{autoencoder_forward.1}
  #allocation0 [shape = 'u32[]', space=smem, size = 0x4, offset = 0x4, fixed_abs, tag = 'smem constant byte address 0x4 - core index']
  #allocation1 [shape = 'u32[144,128]{1,0:T(1,128)}', space=vmem, size = 0x12000, scoped, tag = 'internal scratch']
  %s0 = inlined_call_operand.vmem [shape: f32[32,128], index: 0, kind: input, shape index: {}]
  %s1 = inlined_call_operand.vmem [shape: f32[128,48], index: 1, kind: input, shape index: {}]
  %s2 = inlined_call_operand.vmem [shape: f32[1,48], index: 2, kind: input, shape index: {}]
  %s3 = inlined_call_operand.vmem [shape: f32[48,48], index: 3, kind: input, shape index: {}]
  %s4 = inlined_call_operand.vmem [shape: f32[1,48], index: 4, kind: input, shape index: {}]
  %s5 = inlined_call_operand.vmem [shape: f32[48,128], index: 5, kind: input, shape index: {}]
  %s6 = inlined_call_operand.vmem [shape: f32[1,128], index: 6, kind: input, shape index: {}]
  %s7 = inlined_call_operand.vmem [shape: f32[32,128], index: 7, kind: output, shape index: {}]
  %s8 = sld [smem:[#allocation0]]
  $region61: #{autoencoder_forward.1} parent=0
    _
  %s10 = ssub.s32 1, %s8
  %s11 = scalar_select 0, %s10, %s8
  loop: start=0, step=1, limit=4
  $region2: #{autoencoder_forward.1} parent=0 // loop_pre_header
    _
  $region3: #{autoencoder_forward.1} parent=0 // loop_header
    %s13 = sphi 0, %s17
    %p14 = scmp.ge.s32.totalorder %s13, 4
    %s23 = sphi 0, %s25
    %s26 = sphi 0, %s23
    %s27 = sphi 0, %s26
    %s43 = sphi 0, %s27
    %s47 = sphi 0, %s47
    %s49 = sphi 0, %s47
    %s50 = sphi 0, %s49
    %s64 = sphi 0, %s50
    %s68 = sphi 0, %s68
    %s70 = sphi 0, %s68
    %s71 = sphi 0, %s70
    %s85 = sphi 0, %s71
    %s89 = sphi 0, %s89
    %s91 = sphi 0, %s89
    %s92 = sphi 0, %s91
    %s106 = sphi 0, %s92
    %s110 = sphi 0, %s110
    %s112 = sphi 0, %s110
    %s113 = sphi 0, %s112
    %s127 = sphi 0, %s113
    %s131 = sphi 0, %s131
    %s133 = sphi 0, %s131
    %s134 = sphi 0, %s133
    %s148 = sphi 0, %s134
    %s152 = sphi 0, %s152
    %s154 = sphi 0, %s152
    %s155 = sphi 0, %s154
    %s169 = sphi 0, %s155
    %s175 = sphi 0, %s177
    %s178 = sphi 0, %s175
    %s179 = sphi 0, %s178
    %s195 = sphi 0, %s179
  $region4: #{autoencoder_forward.1} parent=0 // loop_header_branch
    %16 = sbr.rel (%p14) target = $region8
  $region5: #{autoencoder_forward.1} parent=0 // loop_body
    %s18 = ssub.s32 %s13, 1
    %s19 = ssub.s32 %s13, 2
    %s20 = sadd.s32 %s13, 1
    %s21 = ssub.s32 %s13, %s20
    %p22 = scmp.eq.s32.totalorder %s21, 0
    %s24 = sadd.s32 %s23, 1
    %s25 = scalar_select %p22, %s23, %s24
    %p28 = pneg %p22
    %p29 = scmp.eq.s32.totalorder %s13, 1
    %p30 = por %p28, %p29
    %p31 = scmp.ne.s32.totalorder %s23, %s26
    %p32 = scmp.eq.s32.totalorder %s13, 0
    %p33 = por %p31, %p32
    %p34 = scmp.ne.s32.totalorder %s23, %s26
    %p35 = scmp.eq.s32.totalorder %s18, 1
    %p36 = por %p34, %p35
    %p37 = scmp.ne.s32.totalorder %s26, %s27
    %p38 = scmp.eq.s32.totalorder %s18, 0
    %p39 = por %p37, %p38
    %p40 = scmp.ne.s32.totalorder %s26, %s27
    %p41 = scmp.eq.s32.totalorder %s19, 1
    %p42 = por %p40, %p41
    %p44 = scmp.ne.s32.totalorder %s27, %s43
    %p45 = scmp.eq.s32.totalorder %s19, 0
    %p46 = por %p44, %p45
    %s48 = sadd.s32 %s47, 1
    %p51 = scmp.eq.s32.totalorder %s13, 1
    %p52 = scmp.ne.s32.totalorder %s47, %s49
    %p53 = scmp.eq.s32.totalorder %s13, 0
    %p54 = por %p52, %p53
    %p55 = scmp.ne.s32.totalorder %s47, %s49
    %p56 = scmp.eq.s32.totalorder %s18, 1
    %p57 = por %p55, %p56
    %p58 = scmp.ne.s32.totalorder %s49, %s50
    %p59 = scmp.eq.s32.totalorder %s18, 0
    %p60 = por %p58, %p59
    %p61 = scmp.ne.s32.totalorder %s49, %s50
    %p62 = scmp.eq.s32.totalorder %s19, 1
    %p63 = por %p61, %p62
    %p65 = scmp.ne.s32.totalorder %s50, %s64
    %p66 = scmp.eq.s32.totalorder %s19, 0
    %p67 = por %p65, %p66
    %s69 = sadd.s32 %s68, 1
    %p72 = scmp.eq.s32.totalorder %s13, 1
    %p73 = scmp.ne.s32.totalorder %s68, %s70
    %p74 = scmp.eq.s32.totalorder %s13, 0
    %p75 = por %p73, %p74
    %p76 = scmp.ne.s32.totalorder %s68, %s70
    %p77 = scmp.eq.s32.totalorder %s18, 1
    %p78 = por %p76, %p77
    %p79 = scmp.ne.s32.totalorder %s70, %s71
    %p80 = scmp.eq.s32.totalorder %s18, 0
    %p81 = por %p79, %p80
    %p82 = scmp.ne.s32.totalorder %s70, %s71
    %p83 = scmp.eq.s32.totalorder %s19, 1
    %p84 = por %p82, %p83
    %p86 = scmp.ne.s32.totalorder %s71, %s85
    %p87 = scmp.eq.s32.totalorder %s19, 0
    %p88 = por %p86, %p87
    %s90 = sadd.s32 %s89, 1
    %p93 = scmp.eq.s32.totalorder %s13, 1
    %p94 = scmp.ne.s32.totalorder %s89, %s91
    %p95 = scmp.eq.s32.totalorder %s13, 0
    %p96 = por %p94, %p95
    %p97 = scmp.ne.s32.totalorder %s89, %s91
    %p98 = scmp.eq.s32.totalorder %s18, 1
    %p99 = por %p97, %p98
    %p100 = scmp.ne.s32.totalorder %s91, %s92
    %p101 = scmp.eq.s32.totalorder %s18, 0
    %p102 = por %p100, %p101
    %p103 = scmp.ne.s32.totalorder %s91, %s92
    %p104 = scmp.eq.s32.totalorder %s19, 1
    %p105 = por %p103, %p104
    %p107 = scmp.ne.s32.totalorder %s92, %s106
    %p108 = scmp.eq.s32.totalorder %s19, 0
    %p109 = por %p107, %p108
    %s111 = sadd.s32 %s110, 1
    %p114 = scmp.eq.s32.totalorder %s13, 1
    %p115 = scmp.ne.s32.totalorder %s110, %s112
    %p116 = scmp.eq.s32.totalorder %s13, 0
    %p117 = por %p115, %p116
    %p118 = scmp.ne.s32.totalorder %s110, %s112
    %p119 = scmp.eq.s32.totalorder %s18, 1
    %p120 = por %p118, %p119
    %p121 = scmp.ne.s32.totalorder %s112, %s113
    %p122 = scmp.eq.s32.totalorder %s18, 0
    %p123 = por %p121, %p122
    %p124 = scmp.ne.s32.totalorder %s112, %s113
    %p125 = scmp.eq.s32.totalorder %s19, 1
    %p126 = por %p124, %p125
    %p128 = scmp.ne.s32.totalorder %s113, %s127
    %p129 = scmp.eq.s32.totalorder %s19, 0
    %p130 = por %p128, %p129
    %s132 = sadd.s32 %s131, 1
    %p135 = scmp.eq.s32.totalorder %s13, 1
    %p136 = scmp.ne.s32.totalorder %s131, %s133
    %p137 = scmp.eq.s32.totalorder %s13, 0
    %p138 = por %p136, %p137
    %p139 = scmp.ne.s32.totalorder %s131, %s133
    %p140 = scmp.eq.s32.totalorder %s18, 1
    %p141 = por %p139, %p140
    %p142 = scmp.ne.s32.totalorder %s133, %s134
    %p143 = scmp.eq.s32.totalorder %s18, 0
    %p144 = por %p142, %p143
    %p145 = scmp.ne.s32.totalorder %s133, %s134
    %p146 = scmp.eq.s32.totalorder %s19, 1
    %p147 = por %p145, %p146
    %p149 = scmp.ne.s32.totalorder %s134, %s148
    %p150 = scmp.eq.s32.totalorder %s19, 0
    %p151 = por %p149, %p150
    %s153 = sadd.s32 %s152, 1
    %p156 = scmp.eq.s32.totalorder %s13, 1
    %p157 = scmp.ne.s32.totalorder %s152, %s154
    %p158 = scmp.eq.s32.totalorder %s13, 0
    %p159 = por %p157, %p158
    %p160 = scmp.ne.s32.totalorder %s152, %s154
    %p161 = scmp.eq.s32.totalorder %s18, 1
    %p162 = por %p160, %p161
    %p163 = scmp.ne.s32.totalorder %s154, %s155
    %p164 = scmp.eq.s32.totalorder %s18, 0
    %p165 = por %p163, %p164
    %p166 = scmp.ne.s32.totalorder %s154, %s155
    %p167 = scmp.eq.s32.totalorder %s19, 1
    %p168 = por %p166, %p167
    %p170 = scmp.ne.s32.totalorder %s155, %s169
    %p171 = scmp.eq.s32.totalorder %s19, 0
    %p172 = por %p170, %p171
    %s173 = ssub.s32 %s13, %s20
    %p174 = scmp.eq.s32.totalorder %s173, 0
    %s176 = sadd.s32 %s175, 1
    %s177 = scalar_select %p174, %s175, %s176
    %p180 = pneg %p174
    %p181 = scmp.eq.s32.totalorder %s13, 1
    %p182 = por %p180, %p181
    %p183 = scmp.ne.s32.totalorder %s175, %s178
    %p184 = scmp.eq.s32.totalorder %s13, 0
    %p185 = por %p183, %p184
    %p186 = scmp.ne.s32.totalorder %s175, %s178
    %p187 = scmp.eq.s32.totalorder %s18, 1
    %p188 = por %p186, %p187
    %p189 = scmp.ne.s32.totalorder %s178, %s179
    %p190 = scmp.eq.s32.totalorder %s18, 0
    %p191 = por %p189, %p190
    %p192 = scmp.ne.s32.totalorder %s178, %s179
    %p193 = scmp.eq.s32.totalorder %s19, 1
    %p194 = por %p192, %p193
    %p196 = scmp.ne.s32.totalorder %s179, %s195
    %p197 = scmp.eq.s32.totalorder %s19, 0
    %p198 = por %p196, %p197
    %p199 = scmp.le.s32.totalorder 1, %s13
    %p200 = scmp.lt.s32.totalorder %s13, 3
    %p201 = pnand %p199, %p200
    %p202 = pneg %p201
    // Predicated region
    $region9: #{autoencoder_forward.1} parent=5 // pred_check
      _
    $region10: #{autoencoder_forward.1} parent=5 // pred_check_branch
      %204 = sbr.rel (%p201) target = $region12
    $region11: #{autoencoder_forward.1} parent=5 // pred_region
      %s205 = ssub.s32 %s13, 1
      // Predicated region
      $region13: #{autoencoder_forward.1} parent=11 // pred_check
        %p206 = pneg %p60
      $region14: #{autoencoder_forward.1} parent=11 // pred_check_branch
        %208 = sbr.rel (%p206) target = $region16
      $region15: #{autoencoder_forward.1} parent=11 // pred_region
        _
      $region16: #{autoencoder_forward.1} parent=11 // pred_fallthru
        _
      // Predicated region
      $region17: #{autoencoder_forward.1} parent=11 // pred_check
        %p209 = pneg %p81
      $region18: #{autoencoder_forward.1} parent=11 // pred_check_branch
        %211 = sbr.rel (%p209) target = $region20
      $region19: #{autoencoder_forward.1} parent=11 // pred_region
        _
      $region20: #{autoencoder_forward.1} parent=11 // pred_fallthru
        _
      // Predicated region
      $region21: #{autoencoder_forward.1} parent=11 // pred_check
        %p212 = pneg %p102
      $region22: #{autoencoder_forward.1} parent=11 // pred_check_branch
        %214 = sbr.rel (%p212) target = $region24
      $region23: #{autoencoder_forward.1} parent=11 // pred_region
        _
      $region24: #{autoencoder_forward.1} parent=11 // pred_fallthru
        _
      // Predicated region
      $region25: #{autoencoder_forward.1} parent=11 // pred_check
        %p215 = pneg %p123
      $region26: #{autoencoder_forward.1} parent=11 // pred_check_branch
        %217 = sbr.rel (%p215) target = $region28
      $region27: #{autoencoder_forward.1} parent=11 // pred_region
        _
      $region28: #{autoencoder_forward.1} parent=11 // pred_fallthru
        _
      // Predicated region
      $region29: #{autoencoder_forward.1} parent=11 // pred_check
        %p218 = pneg %p144
      $region30: #{autoencoder_forward.1} parent=11 // pred_check_branch
        %220 = sbr.rel (%p218) target = $region32
      $region31: #{autoencoder_forward.1} parent=11 // pred_region
        _
      $region32: #{autoencoder_forward.1} parent=11 // pred_fallthru
        _
      // Predicated region
      $region33: #{autoencoder_forward.1} parent=11 // pred_check
        %p221 = pneg %p165
      $region34: #{autoencoder_forward.1} parent=11 // pred_check_branch
        %223 = sbr.rel (%p221) target = $region36
      $region35: #{autoencoder_forward.1} parent=11 // pred_region
        _
      $region36: #{autoencoder_forward.1} parent=11 // pred_fallthru
        _
    $region12: #{autoencoder_forward.1} parent=5 // pred_fallthru
      _
    %p224 = scmp.lt.s32.totalorder %s13, 2
    // Predicated region
    $region37: #{autoencoder_forward.1} parent=5 // pred_check
      %p225 = pneg %p224
    $region38: #{autoencoder_forward.1} parent=5 // pred_check_branch
      %227 = sbr.rel (%p225) target = $region40
    $region39: #{autoencoder_forward.1} parent=5 // pred_region
      // Predicated region
      $region41: #{autoencoder_forward.1} parent=39 // pred_check
        %p228 = pneg %p33
      $region42: #{autoencoder_forward.1} parent=39 // pred_check_branch
        %230 = sbr.rel (%p228) target = $region44
      $region43: #{autoencoder_forward.1} parent=39 // pred_region
        %s231 = smul.u32 2, %s13
        %p232 = scmp.lt.s32.totalorder %s231, 3
        %s233 = scalar_select %p232, %s231, 3
        %s234 = smul.addr %s233, 8
        %s235 = scalar_lea.vmem %s0, %s234
        %s236 = smul.u32 2, %s13
      $region44: #{autoencoder_forward.1} parent=39 // pred_fallthru
        _
    $region40: #{autoencoder_forward.1} parent=5 // pred_fallthru
      _
    %p237 = scmp.le.s32.totalorder 1, %s13
    %p238 = scmp.lt.s32.totalorder %s13, 3
    %p239 = pnand %p237, %p238
    %p240 = pneg %p239
    // Predicated region
    $region45: #{autoencoder_forward.1} parent=5 // pred_check
      _
    $region46: #{autoencoder_forward.1} parent=5 // pred_check_branch
      %242 = sbr.rel (%p239) target = $region48
    $region47: #{autoencoder_forward.1} parent=5 // pred_region
      %s243 = ssub.s32 %s13, 1
      %s244 = smul.u32 2, %s18
      %p245 = scmp.lt.s32.totalorder %s244, 3
      %s246 = scalar_select %p245, %s244, 3
      %s247 = smul.addr %s246, 8
      %s248 = scalar_lea.vmem %s0, %s247
      %p249 = pneg %p39
      %p250 = pneg %p36
      %p251 = pneg %p60
      %p252 = pneg %p57
      %p253 = pneg %p81
      %p254 = pneg %p78
      %p255 = pneg %p102
      %p256 = pneg %p99
      %p257 = pneg %p123
      %p258 = pneg %p120
      %p259 = pneg %p144
      %p260 = pneg %p141
      %p261 = pneg %p165
      %p262 = pneg %p162
      %p263 = pneg %p191
      %p264 = pneg %p188
      %s265 = smul.u32 2, %s18
      %p266 = scmp.lt.s32.totalorder %s265, 3
      %s267 = scalar_select %p266, %s265, 3
      %s268 = smul.addr %s267, 8
      %s269 = scalar_lea.vmem %s7, %s268
      %s270 = smul.u32 2, %s18
      %p271 = scmp.lt.s32.totalorder %s270, 3
      %s272 = scalar_select %p271, %s270, 3
      %s273 = smul.addr %s272, 8
      %s274 = scalar_lea.vmem %s0, %s273
      %s275 = smul.u32 2, %s18
      %s276 = smul.u32 2, %s18
      %p277 = scmp.lt.s32.totalorder %s276, 3
      %s278 = scalar_select %p277, %s276, 3
      %s279 = smul.addr %s278, 8
      %s280 = scalar_lea.vmem %s7, %s279
      %s281 = smul.u32 2, %s18
      %v282 = vld [vmem:[%s274] sm:$0xff]
      %v283 = vld [vmem:[%s274 + $0x8] sm:$0xff]
      %v284 = vld [vmem:[%s1] sm:$0xff]
      %v285 = vld [vmem:[%s1 + $0x8] sm:$0xff]
      %v286 = vld [vmem:[%s1 + $0x10] sm:$0xff]
      %v287 = vld [vmem:[%s1 + $0x18] sm:$0xff]
      %v288 = vld [vmem:[%s1 + $0x20] sm:$0xff]
      %v289 = vld [vmem:[%s1 + $0x28] sm:$0xff]
      %v290 = vld [vmem:[%s1 + $0x30] sm:$0xff]
      %v291 = vld [vmem:[%s1 + $0x38] sm:$0xff]
      %v292 = vld [vmem:[%s1 + $0x40] sm:$0xff]
      %v293 = vld [vmem:[%s1 + $0x48] sm:$0xff]
      %v294 = vld [vmem:[%s1 + $0x50] sm:$0xff]
      %v295 = vld [vmem:[%s1 + $0x58] sm:$0xff]
      %v296 = vld [vmem:[%s1 + $0x60] sm:$0xff]
      %v297 = vld [vmem:[%s1 + $0x68] sm:$0xff]
      %v298 = vld [vmem:[%s1 + $0x70] sm:$0xff]
      %v299 = vld [vmem:[%s1 + $0x78] sm:$0xff]
      %v300 = vld [vmem:[%s2] sm:$0x1]
      %v302 = vlaneseq
      %v303 = vshrl.u32 %v302, 7
      %v304 = vsub.s32 0, %v303
      %v305 = vrot.slane %v300, %v304
      %307 = vmatprep.subr.mxu0 0.0
      %308 = vmatpush1.msra.mxu0 %v284
      %309 = vmatprep.subr.mxu0 0.0
      %310 = vmatpush1.msra.mxu0 %v285
      %311 = vmatprep.subr.mxu0 0.0
      %312 = vmatpush1.msra.mxu0 %v286
      %313 = vmatprep.subr.mxu0 0.0
      %314 = vmatpush1.msra.mxu0 %v287
      %315 = vmatprep.subr.mxu0 0.0
      %316 = vmatpush1.msra.mxu0 %v288
      %317 = vmatprep.subr.mxu0 0.0
      %318 = vmatpush1.msra.mxu0 %v289
      %319 = vmatprep.subr.mxu0 0.0
      %320 = vmatpush1.msra.mxu0 %v290
      %321 = vmatprep.subr.mxu0 0.0
      %322 = vmatpush1.msra.mxu0 %v291
      %323 = vmatprep.subr.mxu0 0.0
      %324 = vmatpush1.msra.mxu0 %v292
      %325 = vmatprep.subr.mxu0 0.0
      %326 = vmatpush1.msra.mxu0 %v293
      %327 = vmatprep.subr.mxu0 0.0
      %328 = vmatpush1.msra.mxu0 %v294
      %329 = vmatprep.subr.mxu0 0.0
      %330 = vmatpush1.msra.mxu0 %v295
      %331 = vmatprep.subr.mxu0 0.0
      %332 = vmatpush1.msra.mxu0 %v296
      %333 = vmatprep.subr.mxu0 0.0
      %334 = vmatpush1.msra.mxu0 %v297
      %335 = vmatprep.subr.mxu0 0.0
      %336 = vmatpush1.msra.mxu0 %v298
      %337 = vmatprep.subr.mxu0 0.0
      %338 = vmatpush1.msra.mxu0 %v299
      %339 = vmatprep.subr.mxu0 0.0
      %340 = vmatpush1.msra.mxu0 0.0
      %341 = vmatprep.subr.mxu0 0.0
      %342 = vmatpush1.msra.mxu0 0.0
      %343 = vmatprep.subr.mxu0 0.0
      %344 = vmatpush1.msra.mxu0 0.0
      %345 = vmatprep.subr.mxu0 0.0
      %346 = vmatpush1.msra.mxu0 0.0
      %347 = vmatprep.subr.mxu0 0.0
      %348 = vmatpush1.msra.mxu0 0.0
      %349 = vmatprep.subr.mxu0 0.0
      %350 = vmatpush1.msra.mxu0 0.0
      %351 = vmatprep.subr.mxu0 0.0
      %352 = vmatpush1.msra.mxu0 0.0
      %353 = vmatprep.subr.mxu0 0.0
      %354 = vmatpush1.msra.mxu0 0.0
      %355 = vmatprep.subr.mxu0 0.0
      %356 = vmatpush1.msra.mxu0 0.0
      %357 = vmatprep.subr.mxu0 0.0
      %358 = vmatpush1.msra.mxu0 0.0
      %359 = vmatprep.subr.mxu0 0.0
      %360 = vmatpush1.msra.mxu0 0.0
      %361 = vmatprep.subr.mxu0 0.0
      %362 = vmatpush1.msra.mxu0 0.0
      %363 = vmatprep.subr.mxu0 0.0
      %364 = vmatpush1.msra.mxu0 0.0
      %365 = vmatprep.subr.mxu0 0.0
      %366 = vmatpush1.msra.mxu0 0.0
      %367 = vmatprep.subr.mxu0 0.0
      %368 = vmatpush1.msra.mxu0 0.0
      %369 = vmatprep.subr.mxu0 0.0
      %370 = vmatpush1.msra.mxu0 0.0
      %371 = vmatprep.mubr.f32.mxu0 0.0
      %372 = vmatmul.mubr.f32.gmra.mrb[0].mxu0 %v282
      %v373 = vpop.f32.mrb[0].mxu0
      %v374 = vadd.f32 %v305, %v373
      %v375 = vpop.f32.mrb[0].mxu0
      %376 = vmatprep.mubr.f32.mxu0 0.0
      %377 = vmatmul.mubr.f32.gmra.mrb[0].mxu0 %v283
      %v378 = vpop.f32.mrb[0].mxu0
      %v379 = vadd.f32 %v305, %v378
      %v380 = vpop.f32.mrb[0].mxu0
      %381 = vdwg.mxu0
      %v382 = vmax.f32 %v374, 0.0
      %v383 = vmax.f32 %v379, 0.0
      %v384 = vld [vmem:[%s3] sm:$0xff]
      %v385 = vld [vmem:[%s3 + $0x8] sm:$0xff]
      %v386 = vld [vmem:[%s3 + $0x10] sm:$0xff]
      %v387 = vld [vmem:[%s3 + $0x18] sm:$0xff]
      %v388 = vld [vmem:[%s3 + $0x20] sm:$0xff]
      %v389 = vld [vmem:[%s3 + $0x28] sm:$0xff]
      %v390 = vld [vmem:[%s4] sm:$0x1]
      %v392 = vlaneseq
      %v393 = vshrl.u32 %v392, 7
      %v394 = vsub.s32 0, %v393
      %v395 = vrot.slane %v390, %v394
      %vm397 = vcmask 392192
      %v399 = vsel %vm397, %v382, 0
      %v402 = vsel %vm397, %v383, 0
      %404 = vmatprep.subr.mxu0 0.0
      %405 = vmatpush1.msra.mxu0 %v384
      %406 = vmatprep.subr.mxu0 0.0
      %407 = vmatpush1.msra.mxu0 %v385
      %408 = vmatprep.subr.mxu0 0.0
      %409 = vmatpush1.msra.mxu0 %v386
      %410 = vmatprep.subr.mxu0 0.0
      %411 = vmatpush1.msra.mxu0 %v387
      %412 = vmatprep.subr.mxu0 0.0
      %413 = vmatpush1.msra.mxu0 %v388
      %414 = vmatprep.subr.mxu0 0.0
      %415 = vmatpush1.msra.mxu0 %v389
      %416 = vmatprep.subr.mxu0 0.0
      %417 = vmatpush1.msra.mxu0 0.0
      %418 = vmatprep.subr.mxu0 0.0
      %419 = vmatpush1.msra.mxu0 0.0
      %420 = vmatprep.subr.mxu0 0.0
      %421 = vmatpush1.msra.mxu0 0.0
      %422 = vmatprep.subr.mxu0 0.0
      %423 = vmatpush1.msra.mxu0 0.0
      %424 = vmatprep.subr.mxu0 0.0
      %425 = vmatpush1.msra.mxu0 0.0
      %426 = vmatprep.subr.mxu0 0.0
      %427 = vmatpush1.msra.mxu0 0.0
      %428 = vmatprep.subr.mxu0 0.0
      %429 = vmatpush1.msra.mxu0 0.0
      %430 = vmatprep.subr.mxu0 0.0
      %431 = vmatpush1.msra.mxu0 0.0
      %432 = vmatprep.subr.mxu0 0.0
      %433 = vmatpush1.msra.mxu0 0.0
      %434 = vmatprep.subr.mxu0 0.0
      %435 = vmatpush1.msra.mxu0 0.0
      %436 = vmatprep.subr.mxu0 0.0
      %437 = vmatpush1.msra.mxu0 0.0
      %438 = vmatprep.subr.mxu0 0.0
      %439 = vmatpush1.msra.mxu0 0.0
      %440 = vmatprep.subr.mxu0 0.0
      %441 = vmatpush1.msra.mxu0 0.0
      %442 = vmatprep.subr.mxu0 0.0
      %443 = vmatpush1.msra.mxu0 0.0
      %444 = vmatprep.subr.mxu0 0.0
      %445 = vmatpush1.msra.mxu0 0.0
      %446 = vmatprep.subr.mxu0 0.0
      %447 = vmatpush1.msra.mxu0 0.0
      %448 = vmatprep.subr.mxu0 0.0
      %449 = vmatpush1.msra.mxu0 0.0
      %450 = vmatprep.subr.mxu0 0.0
      %451 = vmatpush1.msra.mxu0 0.0
      %452 = vmatprep.subr.mxu0 0.0
      %453 = vmatpush1.msra.mxu0 0.0
      %454 = vmatprep.subr.mxu0 0.0
      %455 = vmatpush1.msra.mxu0 0.0
      %456 = vmatprep.subr.mxu0 0.0
      %457 = vmatpush1.msra.mxu0 0.0
      %458 = vmatprep.subr.mxu0 0.0
      %459 = vmatpush1.msra.mxu0 0.0
      %460 = vmatprep.subr.mxu0 0.0
      %461 = vmatpush1.msra.mxu0 0.0
      %462 = vmatprep.subr.mxu0 0.0
      %463 = vmatpush1.msra.mxu0 0.0
      %464 = vmatprep.subr.mxu0 0.0
      %465 = vmatpush1.msra.mxu0 0.0
      %466 = vmatprep.subr.mxu0 0.0
      %467 = vmatpush1.msra.mxu0 0.0
      %468 = vmatprep.mubr.f32.mxu0 0.0
      %469 = vmatmul.mubr.f32.gmra.mrb[0].mxu0 %v399
      %v470 = vpop.f32.mrb[0].mxu0
      %v471 = vadd.f32 %v395, %v470
      %v472 = vpop.f32.mrb[0].mxu0
      %473 = vmatprep.mubr.f32.mxu0 0.0
      %474 = vmatmul.mubr.f32.gmra.mrb[0].mxu0 %v402
      %v475 = vpop.f32.mrb[0].mxu0
      %v476 = vadd.f32 %v395, %v475
      %v477 = vpop.f32.mrb[0].mxu0
      %478 = vdwg.mxu0
      %v479 = vmax.f32 %v471, 0.0
      %v480 = vmax.f32 %v476, 0.0
      %v481 = vld [vmem:[%s5] sm:$0xff]
      %v482 = vld [vmem:[%s5 + $0x8] sm:$0xff]
      %v483 = vld [vmem:[%s5 + $0x10] sm:$0xff]
      %v484 = vld [vmem:[%s5 + $0x18] sm:$0xff]
      %v485 = vld [vmem:[%s5 + $0x20] sm:$0xff]
      %v486 = vld [vmem:[%s5 + $0x28] sm:$0xff]
      %v487 = vld [vmem:[%s6] sm:$0x1]
      %v489 = vlaneseq
      %v490 = vshrl.u32 %v489, 7
      %v491 = vsub.s32 0, %v490
      %v492 = vrot.slane %v487, %v491
      %v495 = vsel %vm397, %v479, 0
      %v498 = vsel %vm397, %v480, 0
      %500 = vmatprep.subr.mxu0 0.0
      %501 = vmatpush1.msra.mxu0 %v481
      %502 = vmatprep.subr.mxu0 0.0
      %503 = vmatpush1.msra.mxu0 %v482
      %504 = vmatprep.subr.mxu0 0.0
      %505 = vmatpush1.msra.mxu0 %v483
      %506 = vmatprep.subr.mxu0 0.0
      %507 = vmatpush1.msra.mxu0 %v484
      %508 = vmatprep.subr.mxu0 0.0
      %509 = vmatpush1.msra.mxu0 %v485
      %510 = vmatprep.subr.mxu0 0.0
      %511 = vmatpush1.msra.mxu0 %v486
      %512 = vmatprep.subr.mxu0 0.0
      %513 = vmatpush1.msra.mxu0 0.0
      %514 = vmatprep.subr.mxu0 0.0
      %515 = vmatpush1.msra.mxu0 0.0
      %516 = vmatprep.subr.mxu0 0.0
      %517 = vmatpush1.msra.mxu0 0.0
      %518 = vmatprep.subr.mxu0 0.0
      %519 = vmatpush1.msra.mxu0 0.0
      %520 = vmatprep.subr.mxu0 0.0
      %521 = vmatpush1.msra.mxu0 0.0
      %522 = vmatprep.subr.mxu0 0.0
      %523 = vmatpush1.msra.mxu0 0.0
      %524 = vmatprep.subr.mxu0 0.0
      %525 = vmatpush1.msra.mxu0 0.0
      %526 = vmatprep.subr.mxu0 0.0
      %527 = vmatpush1.msra.mxu0 0.0
      %528 = vmatprep.subr.mxu0 0.0
      %529 = vmatpush1.msra.mxu0 0.0
      %530 = vmatprep.subr.mxu0 0.0
      %531 = vmatpush1.msra.mxu0 0.0
      %532 = vmatprep.subr.mxu0 0.0
      %533 = vmatpush1.msra.mxu0 0.0
      %534 = vmatprep.subr.mxu0 0.0
      %535 = vmatpush1.msra.mxu0 0.0
      %536 = vmatprep.subr.mxu0 0.0
      %537 = vmatpush1.msra.mxu0 0.0
      %538 = vmatprep.subr.mxu0 0.0
      %539 = vmatpush1.msra.mxu0 0.0
      %540 = vmatprep.subr.mxu0 0.0
      %541 = vmatpush1.msra.mxu0 0.0
      %542 = vmatprep.subr.mxu0 0.0
      %543 = vmatpush1.msra.mxu0 0.0
      %544 = vmatprep.subr.mxu0 0.0
      %545 = vmatpush1.msra.mxu0 0.0
      %546 = vmatprep.subr.mxu0 0.0
      %547 = vmatpush1.msra.mxu0 0.0
      %548 = vmatprep.subr.mxu0 0.0
      %549 = vmatpush1.msra.mxu0 0.0
      %550 = vmatprep.subr.mxu0 0.0
      %551 = vmatpush1.msra.mxu0 0.0
      %552 = vmatprep.subr.mxu0 0.0
      %553 = vmatpush1.msra.mxu0 0.0
      %554 = vmatprep.subr.mxu0 0.0
      %555 = vmatpush1.msra.mxu0 0.0
      %556 = vmatprep.subr.mxu0 0.0
      %557 = vmatpush1.msra.mxu0 0.0
      %558 = vmatprep.subr.mxu0 0.0
      %559 = vmatpush1.msra.mxu0 0.0
      %560 = vmatprep.subr.mxu0 0.0
      %561 = vmatpush1.msra.mxu0 0.0
      %562 = vmatprep.subr.mxu0 0.0
      %563 = vmatpush1.msra.mxu0 0.0
      %564 = vmatprep.mubr.f32.mxu0 0.0
      %565 = vmatmul.mubr.f32.gmra.mrb[0].mxu0 %v495
      %v566 = vpop.f32.mrb[0].mxu0
      %v567 = vadd.f32 %v492, %v566
      %v568 = vpop.f32.mrb[0].mxu0
      %569 = vmatprep.mubr.f32.mxu0 0.0
      %570 = vmatmul.mubr.f32.gmra.mrb[0].mxu0 %v498
      %v571 = vpop.f32.mrb[0].mxu0
      %v572 = vadd.f32 %v492, %v571
      %v573 = vpop.f32.mrb[0].mxu0
      %574 = vdwg.mxu0
      %v575 = vsub.f32 0.0, %v567
      %v576 = vsub.f32 0.0, %v572
      %v577 = vmul.f32 %v575, 1.442695
      %v578 = vpow.pop %v577
      %v579 = vmul.f32 %v576, 1.442695
      %v580 = vpow.pop %v579
      %v581 = vadd.f32 %v578, 1.0
      %v582 = vadd.f32 %v580, 1.0
      %v583 = vrcp.pop %v581
      %v584 = vmul.f32 1.0, %v583
      %v585 = vrcp.pop %v582
      %v586 = vmul.f32 1.0, %v585
      %587 = vst [vmem:[%s280] sm:$0xff] %v584
      %588 = vst [vmem:[%s280 + $0x8] sm:$0xff] %v586
      %s589 = smul.u32 2, %s18
      %p590 = scmp.lt.s32.totalorder %s589, 3
      %s591 = scalar_select %p590, %s589, 3
      %s592 = smul.addr %s591, 8
      %s593 = scalar_lea.vmem %s7, %s592
      // Predicated region
      $region49: #{autoencoder_forward.1} parent=47 // pred_check
        %p594 = pneg %p188
      $region50: #{autoencoder_forward.1} parent=47 // pred_check_branch
        %596 = sbr.rel (%p594) target = $region52
      $region51: #{autoencoder_forward.1} parent=47 // pred_region
        %s597 = smul.u32 2, %s18
      $region52: #{autoencoder_forward.1} parent=47 // pred_fallthru
        _
    $region48: #{autoencoder_forward.1} parent=5 // pred_fallthru
      _
    %p598 = scmp.le.s32.totalorder 2, %s13
    // Predicated region
    $region53: #{autoencoder_forward.1} parent=5 // pred_check
      %p599 = pneg %p598
    $region54: #{autoencoder_forward.1} parent=5 // pred_check_branch
      %601 = sbr.rel (%p599) target = $region56
    $region55: #{autoencoder_forward.1} parent=5 // pred_region
      %s602 = ssub.s32 %s13, 2
      // Predicated region
      $region57: #{autoencoder_forward.1} parent=55 // pred_check
        %p603 = pneg %p194
      $region58: #{autoencoder_forward.1} parent=55 // pred_check_branch
        %605 = sbr.rel (%p603) target = $region60
      $region59: #{autoencoder_forward.1} parent=55 // pred_region
        %s606 = smul.u32 2, %s19
        %p607 = scmp.lt.s32.totalorder %s606, 3
        %s608 = scalar_select %p607, %s606, 3
        %s609 = smul.addr %s608, 8
        %s610 = scalar_lea.vmem %s7, %s609
      $region60: #{autoencoder_forward.1} parent=55 // pred_fallthru
        _
    $region56: #{autoencoder_forward.1} parent=5 // pred_fallthru
      _
  $region6: #{autoencoder_forward.1} parent=0 // loop_footer
    %s17 = sadd.s32 1, %s13
  $region7: #{autoencoder_forward.1} parent=0 // loop_footer_branch
    %12 = sbr.rel target = $region3
  $region8: #{autoencoder_forward.1} parent=0 // loop_exit
    _

</llo_original>
